<compile_context>
chip_gen: v5e
topology: v5e:2x2
jax: 0.10.0
libtpu: 0.0.40
codegen_flags: <defaults>
</compile_context>

<pallas_src>
import functools

import jax
import jax.numpy as jnp
from jax import lax
from jax.experimental import pallas as pl
from jax.experimental.pallas import tpu as pltpu


# -----------------------------------------------------------------------------
# Pallas kernel
# -----------------------------------------------------------------------------
def head_kernel(feat_ref,    # [TB, H]  bf16  sentence embeddings (batch tile)
                dw_ref,      # [E,  H]  bf16  dense weight (PyTorch layout)
                db_ref,      # [1,  E]  f32   dense bias
                gamma_ref,   # [1,  E]  f32   layernorm weight
                beta_ref,    # [1,  E]  f32   layernorm bias
                emb_ref,     # [TV, E]  bf16  embedding-table tile
                sb_ref,      # [1, TV]  f32   sim_bias tile
                sim_ref,     # [TB, TV] f32   out: similarity logits
                h_scratch,   # [TB, E]  bf16  scratch: normalized hidden
                *, eps):
    j = pl.program_id(1)

    # ---- dense + gelu + layernorm: only once per batch tile (j == 0) --------
    @pl.when(j == 0)
    def _():
        x = feat_ref[...]
        # x @ dense_w.T  (contract H with H; weight stays [E, H])
        g = lax.dot_general(
            x, dw_ref[...],
            dimension_numbers=(((1,), (1,)), ((), ())),
            preferred_element_type=jnp.float32,
        ) + db_ref[...]
        # tanh-approximate GELU (f32, EUP tanh)
        g = 0.5 * g * (1.0 + jnp.tanh(0.7978845608028654 * (g + 0.044715 * g * g * g)))
        # LayerNorm over E (f32)
        mu = jnp.mean(g, axis=-1, keepdims=True)
        var = jnp.mean(jnp.square(g - mu), axis=-1, keepdims=True)
        hn = (g - mu) * lax.rsqrt(var + eps)
        hn = hn * gamma_ref[...] + beta_ref[...]
        h_scratch[...] = hn.astype(h_scratch.dtype)

    # ---- tied-embedding similarity for this vocab tile ----------------------
    h = h_scratch[...]
    sim_ref[...] = lax.dot_general(
        h, emb_ref[...],
        dimension_numbers=(((1,), (1,)), ((), ())),   # h @ emb.T
        preferred_element_type=jnp.float32,
    ) + sb_ref[...]


# -----------------------------------------------------------------------------
# Wrapper
# -----------------------------------------------------------------------------
def _round_up(x, m):
    return (x + m - 1) // m * m


def brand_color_head_forward(features,       # [B, S, H] f32
                             dense_w,        # [E, H]    f32 (PyTorch Linear layout)
                             dense_b,        # [E]       f32
                             ln_gamma,       # [E]       f32
                             ln_beta,        # [E]       f32
                             embed_weight,   # [V, E]    f32 (nn.Embedding weight)
                             sim_bias,       # [V]       f32
                             *,
                             eps=1e-5,
                             tb=None,
                             tv=None):
    B, _, H = features.shape
    E = dense_w.shape[0]
    V = embed_weight.shape[0]

    sent = features[:, 0, :].astype(jnp.float32)          # [B, H]

    # tile sizes: sublane-aligned batch tile, lane-aligned vocab tile
    if tb is None:
        tb = min(_round_up(B, 8), 256)
    if tv is None:
        tv = min(_round_up(V, 128), 512)
    Bp = _round_up(B, tb)
    Vp = _round_up(V, tv)

    # pad to tile multiples (zeros are harmless; sliced off at the end)
    sent_p = jnp.pad(sent, ((0, Bp - B), (0, 0)))
    emb_p = jnp.pad(embed_weight.astype(jnp.float32), ((0, Vp - V), (0, 0)))
    sb_p = jnp.pad(sim_bias.astype(jnp.float32), ((0, Vp - V),)).reshape(1, Vp)

    # bf16 MXU operands (f32 accumulation inside the kernel)
    sent_bf = sent_p.astype(jnp.bfloat16)
    dw_bf = dense_w.astype(jnp.bfloat16)
    emb_bf = emb_p.astype(jnp.bfloat16)

    db = dense_b.reshape(1, E).astype(jnp.float32)
    gm = ln_gamma.reshape(1, E).astype(jnp.float32)
    bt = ln_beta.reshape(1, E).astype(jnp.float32)

    grid = (Bp // tb, Vp // tv)

    sim = pl.pallas_call(
        functools.partial(head_kernel, eps=float(eps)),
        out_shape=jax.ShapeDtypeStruct((Bp, Vp), jnp.float32),
        grid_spec=pltpu.PrefetchScalarGridSpec(
            num_scalar_prefetch=0,
            grid=grid,
            in_specs=[
                pl.BlockSpec((tb, H), lambda i, j: (i, 0)),   # sentence emb (batch tile)
                pl.BlockSpec((E, H), lambda i, j: (0, 0)),    # dense weight (resident)
                pl.BlockSpec((1, E), lambda i, j: (0, 0)),    # dense bias
                pl.BlockSpec((1, E), lambda i, j: (0, 0)),    # LN gamma
                pl.BlockSpec((1, E), lambda i, j: (0, 0)),    # LN beta
                pl.BlockSpec((tv, E), lambda i, j: (j, 0)),   # embedding tile
                pl.BlockSpec((1, tv), lambda i, j: (0, j)),   # sim_bias tile
            ],
            out_specs=pl.BlockSpec((tb, tv), lambda i, j: (i, j)),
            scratch_shapes=[pltpu.VMEM((tb, E), jnp.bfloat16)],
        ),
        compiler_params=pltpu.CompilerParams(
            dimension_semantics=("parallel", "arbitrary"),
        ),
    )(sent_bf, dw_bf, db, gm, bt, emb_bf, sb_p)

    return sim[:B, :V]


# -----------------------------------------------------------------------------
# Pure-JAX reference (mirrors the kernel's math path: bf16 operands, tanh gelu)
# -----------------------------------------------------------------------------
def head_reference(features, dense_w, dense_b, ln_gamma, ln_beta,
                   embed_weight, sim_bias, eps=1e-5):
    sent = features[:, 0, :].astype(jnp.bfloat16)
    g = jnp.dot(sent, dense_w.astype(jnp.bfloat16).T,
                preferred_element_type=jnp.float32) + dense_b
    g = 0.5 * g * (1.0 + jnp.tanh(0.7978845608028654 * (g + 0.044715 * g ** 3)))
    mu = jnp.mean(g, axis=-1, keepdims=True)
    var = jnp.mean(jnp.square(g - mu), axis=-1, keepdims=True)
    h = (g - mu) * lax.rsqrt(var + eps)
    h = h * ln_gamma + ln_beta
    sim = jnp.dot(h.astype(jnp.bfloat16), embed_weight.astype(jnp.bfloat16).T,
                  preferred_element_type=jnp.float32) + sim_bias
    return sim


if __name__ == "__main__":
    # small shapes consistent with the module (lane/sublane friendly)
    B = 16          # batch
    S = 8           # sequence length
    H = 128         # config.hidden_size
    E = 128         # emb_dim
    V = 256         # vocab_size
    EPS = 1e-5
    INIT_RANGE = 0.02

    key = jax.random.PRNGKey(0)
    keys = jax.random.split(key, 6)

    # parameter init matching _init_weights semantics
    dense_w = INIT_RANGE * jax.random.normal(keys[0], (E, H), jnp.float32)
    dense_b = jnp.zeros((E,), jnp.float32)
    ln_gamma = jnp.ones((E,), jnp.float32)
    ln_beta = jnp.zeros((E,), jnp.float32)
    embed_weight = INIT_RANGE * jax.random.normal(keys[1], (V, E), jnp.float32)
    sim_bias = jnp.zeros((V,), jnp.float32)

    # example input
    features = jax.random.normal(keys[2], (B, S, H), jnp.float32)

    sim = brand_color_head_forward(
        features, dense_w, dense_b, ln_gamma, ln_beta, embed_weight, sim_bias,
        eps=EPS, tb=8, tv=128,   # grid = (2, 2): exercises both grid axes
    )
    sim = jax.block_until_ready(sim)
    assert sim.shape == (B, V)

    ref = jax.block_until_ready(
        head_reference(features, dense_w, dense_b, ln_gamma, ln_beta,
                       embed_weight, sim_bias, eps=EPS))
    assert jnp.allclose(sim, ref, rtol=5e-2, atol=5e-2), \
        f"max abs err {jnp.max(jnp.abs(sim - ref))}"

    print("KERNEL_OK")
</pallas_src>

<mosaic_0001>
module attributes {stable_mosaic.version = 11 : i64} {
  func.func @head_kernel(%arg0: i32, %arg1: i32, %arg2: memref<8x128xbf16, #tpu.memory_space<vmem>>, %arg3: memref<128x128xbf16, #tpu.memory_space<vmem>>, %arg4: memref<1x128xf32, #tpu.memory_space<vmem>>, %arg5: memref<1x128xf32, #tpu.memory_space<vmem>>, %arg6: memref<1x128xf32, #tpu.memory_space<vmem>>, %arg7: memref<128x128xbf16, #tpu.memory_space<vmem>>, %arg8: memref<1x128xf32, #tpu.memory_space<vmem>>, %arg9: memref<8x128xf32, #tpu.memory_space<vmem>>, %arg10: memref<8x128xbf16, #tpu.memory_space<vmem>>) attributes {dimension_semantics = [#tpu.dimension_semantics<parallel>, #tpu.dimension_semantics<arbitrary>], iteration_bounds = array<i64: 2, 2>, scalar_prefetch = 0 : i64, scratch_operands = 1 : i64, tpu.core_type = #tpu.core_type<tc>, window_params = [{transform_indices = @transform_0, window_bounds = array<i64: 8, 128>}, {pipeline_mode = #tpu.pipeline_mode<synchronous>, transform_indices = @transform_1, window_bounds = array<i64: 128, 128>}, {pipeline_mode = #tpu.pipeline_mode<synchronous>, transform_indices = @transform_2, window_bounds = array<i64: 1, 128>}, {pipeline_mode = #tpu.pipeline_mode<synchronous>, transform_indices = @transform_3, window_bounds = array<i64: 1, 128>}, {pipeline_mode = #tpu.pipeline_mode<synchronous>, transform_indices = @transform_4, window_bounds = array<i64: 1, 128>}, {transform_indices = @transform_5, window_bounds = array<i64: 128, 128>}, {transform_indices = @transform_6, window_bounds = array<i64: 1, 128>}, {transform_indices = @transform_7, window_bounds = array<i64: 8, 128>}]} {
    %c0_i32 = arith.constant 0 : i32
    %0 = arith.cmpi eq, %arg1, %c0_i32 : i32
    %1 = arith.extui %0 : i1 to i32
    %c0_i32_0 = arith.constant 0 : i32
    %2 = arith.cmpi ne, %1, %c0_i32_0 : i32
    scf.if %2 {
      %c0_8 = arith.constant 0 : index
      %c0_9 = arith.constant 0 : index
      %10 = vector.load %arg2[%c0_8, %c0_9] : memref<8x128xbf16, #tpu.memory_space<vmem>>, vector<8x128xbf16>
      %c0_10 = arith.constant 0 : index
      %c0_11 = arith.constant 0 : index
      %11 = vector.load %arg3[%c0_10, %c0_11] : memref<128x128xbf16, #tpu.memory_space<vmem>>, vector<128x128xbf16>
      %cst_12 = arith.constant dense<0.000000e+00> : vector<8x128xf32>
      %12 = tpu.matmul %10, %11, %cst_12 {dimension_numbers = #tpu.dot_dimension_numbers<[1], [1], [0], [0], [0, 0, 1, 0], [], []>} : vector<8x128xbf16>, vector<128x128xbf16>, vector<8x128xf32> -> vector<8x128xf32>
      %c0_13 = arith.constant 0 : index
      %c0_14 = arith.constant 0 : index
      %13 = vector.load %arg4[%c0_13, %c0_14] : memref<1x128xf32, #tpu.memory_space<vmem>>, vector<1x128xf32>
      %14 = vector.broadcast %13 : vector<1x128xf32> to vector<8x128xf32>
      %15 = arith.addf %12, %14 : vector<8x128xf32>
      %cst_15 = arith.constant 5.000000e-01 : f32
      %16 = vector.broadcast %cst_15 : f32 to vector<8x128xf32>
      %17 = arith.mulf %16, %15 : vector<8x128xf32>
      %cst_16 = arith.constant 4.471500e-02 : f32
      %18 = vector.broadcast %cst_16 : f32 to vector<8x128xf32>
      %19 = arith.mulf %18, %15 : vector<8x128xf32>
      %20 = arith.mulf %19, %15 : vector<8x128xf32>
      %21 = arith.mulf %20, %15 : vector<8x128xf32>
      %22 = arith.addf %15, %21 : vector<8x128xf32>
      %cst_17 = arith.constant 0.797884583 : f32
      %23 = vector.broadcast %cst_17 : f32 to vector<8x128xf32>
      %24 = arith.mulf %23, %22 : vector<8x128xf32>
      %25 = math.tanh %24 : vector<8x128xf32>
      %cst_18 = arith.constant 1.000000e+00 : f32
      %26 = vector.broadcast %cst_18 : f32 to vector<8x128xf32>
      %27 = arith.addf %26, %25 : vector<8x128xf32>
      %28 = arith.mulf %17, %27 : vector<8x128xf32>
      %cst_19 = arith.constant dense<0.000000e+00> : vector<8xf32>
      %29 = vector.multi_reduction <add>, %28, %cst_19 [1] : vector<8x128xf32> to vector<8xf32>
      %30 = vector.shape_cast %29 : vector<8xf32> to vector<8x1xf32>
      %cst_20 = arith.constant 1.280000e+02 : f32
      %31 = vector.broadcast %cst_20 : f32 to vector<8x1xf32>
      %32 = arith.divf %30, %31 : vector<8x1xf32>
      %33 = vector.broadcast %32 : vector<8x1xf32> to vector<8x128xf32>
      %34 = arith.subf %28, %33 : vector<8x128xf32>
      %35 = arith.mulf %34, %34 : vector<8x128xf32>
      %cst_21 = arith.constant dense<0.000000e+00> : vector<8xf32>
      %36 = vector.multi_reduction <add>, %35, %cst_21 [1] : vector<8x128xf32> to vector<8xf32>
      %37 = vector.shape_cast %36 : vector<8xf32> to vector<8x1xf32>
      %cst_22 = arith.constant 1.280000e+02 : f32
      %38 = vector.broadcast %cst_22 : f32 to vector<8x1xf32>
      %39 = arith.divf %37, %38 : vector<8x1xf32>
      %40 = vector.broadcast %32 : vector<8x1xf32> to vector<8x128xf32>
      %41 = arith.subf %28, %40 : vector<8x128xf32>
      %cst_23 = arith.constant 9.99999974E-6 : f32
      %42 = vector.broadcast %cst_23 : f32 to vector<8x1xf32>
      %43 = arith.addf %39, %42 : vector<8x1xf32>
      %44 = math.rsqrt %43 : vector<8x1xf32>
      %45 = vector.broadcast %44 : vector<8x1xf32> to vector<8x128xf32>
      %46 = arith.mulf %41, %45 : vector<8x128xf32>
      %c0_24 = arith.constant 0 : index
      %c0_25 = arith.constant 0 : index
      %47 = vector.load %arg5[%c0_24, %c0_25] : memref<1x128xf32, #tpu.memory_space<vmem>>, vector<1x128xf32>
      %48 = vector.broadcast %47 : vector<1x128xf32> to vector<8x128xf32>
      %49 = arith.mulf %46, %48 : vector<8x128xf32>
      %c0_26 = arith.constant 0 : index
      %c0_27 = arith.constant 0 : index
      %50 = vector.load %arg6[%c0_26, %c0_27] : memref<1x128xf32, #tpu.memory_space<vmem>>, vector<1x128xf32>
      %51 = vector.broadcast %50 : vector<1x128xf32> to vector<8x128xf32>
      %52 = arith.addf %49, %51 : vector<8x128xf32>
      %53 = arith.truncf %52 : vector<8x128xf32> to vector<8x128xbf16>
      %c0_28 = arith.constant 0 : index
      %c0_29 = arith.constant 0 : index
      %54 = vector.load %arg10[%c0_28, %c0_29] : memref<8x128xbf16, #tpu.memory_space<vmem>>, vector<8x128xbf16>
      tpu.vector_store %arg10[%c0_28, %c0_29], %53 {strides = array<i32>} : memref<8x128xbf16, #tpu.memory_space<vmem>>, vector<8x128xbf16>,
    } else {
    }
    %c0 = arith.constant 0 : index
    %c0_1 = arith.constant 0 : index
    %3 = vector.load %arg10[%c0, %c0_1] : memref<8x128xbf16, #tpu.memory_space<vmem>>, vector<8x128xbf16>
    %c0_2 = arith.constant 0 : index
    %c0_3 = arith.constant 0 : index
    %4 = vector.load %arg7[%c0_2, %c0_3] : memref<128x128xbf16, #tpu.memory_space<vmem>>, vector<128x128xbf16>
    %cst = arith.constant dense<0.000000e+00> : vector<8x128xf32>
    %5 = tpu.matmul %3, %4, %cst {dimension_numbers = #tpu.dot_dimension_numbers<[1], [1], [0], [0], [0, 0, 1, 0], [], []>} : vector<8x128xbf16>, vector<128x128xbf16>, vector<8x128xf32> -> vector<8x128xf32>
    %c0_4 = arith.constant 0 : index
    %c0_5 = arith.constant 0 : index
    %6 = vector.load %arg8[%c0_4, %c0_5] : memref<1x128xf32, #tpu.memory_space<vmem>>, vector<1x128xf32>
    %7 = vector.broadcast %6 : vector<1x128xf32> to vector<8x128xf32>
    %8 = arith.addf %5, %7 : vector<8x128xf32>
    %c0_6 = arith.constant 0 : index
    %c0_7 = arith.constant 0 : index
    %9 = vector.load %arg9[%c0_6, %c0_7] : memref<8x128xf32, #tpu.memory_space<vmem>>, vector<8x128xf32>
    tpu.vector_store %arg9[%c0_6, %c0_7], %8 {strides = array<i32>} : memref<8x128xf32, #tpu.memory_space<vmem>>, vector<8x128xf32>,
    return
  }
  func.func @transform_0(%arg0: i32, %arg1: i32) -> (i32, i32) {
    %c0_i32 = arith.constant 0 : i32
    %c0_i32_0 = arith.constant 0 : i32
    return %arg0, %c0_i32 : i32, i32
  }
  func.func @transform_1(%arg0: i32, %arg1: i32) -> (i32, i32) {
    %c0_i32 = arith.constant 0 : i32
    %c0_i32_0 = arith.constant 0 : i32
    %c0_i32_1 = arith.constant 0 : i32
    return %c0_i32, %c0_i32_0 : i32, i32
  }
  func.func @transform_2(%arg0: i32, %arg1: i32) -> (i32, i32) {
    %c0_i32 = arith.constant 0 : i32
    %c0_i32_0 = arith.constant 0 : i32
    %c0_i32_1 = arith.constant 0 : i32
    return %c0_i32, %c0_i32_0 : i32, i32
  }
  func.func @transform_3(%arg0: i32, %arg1: i32) -> (i32, i32) {
    %c0_i32 = arith.constant 0 : i32
    %c0_i32_0 = arith.constant 0 : i32
    %c0_i32_1 = arith.constant 0 : i32
    return %c0_i32, %c0_i32_0 : i32, i32
  }
  func.func @transform_4(%arg0: i32, %arg1: i32) -> (i32, i32) {
    %c0_i32 = arith.constant 0 : i32
    %c0_i32_0 = arith.constant 0 : i32
    %c0_i32_1 = arith.constant 0 : i32
    return %c0_i32, %c0_i32_0 : i32, i32
  }
  func.func @transform_5(%arg0: i32, %arg1: i32) -> (i32, i32) {
    %c0_i32 = arith.constant 0 : i32
    %c0_i32_0 = arith.constant 0 : i32
    return %arg1, %c0_i32 : i32, i32
  }
  func.func @transform_6(%arg0: i32, %arg1: i32) -> (i32, i32) {
    %c0_i32 = arith.constant 0 : i32
    %c0_i32_0 = arith.constant 0 : i32
    return %c0_i32, %arg1 : i32, i32
  }
  func.func @transform_7(%arg0: i32, %arg1: i32) -> (i32, i32) {
    %c0_i32 = arith.constant 0 : i32
    return %arg0, %arg1 : i32, i32
  }
}

</mosaic_0001>

<llo_original>
// kernel: tpu_custom_call.1
$region0: #{tpu_custom_call.1}
  #allocation0 [shape = 'u32[]', space=smem, size = 0x4, offset = 0x4, fixed_abs, tag = 'smem constant byte address 0x4 - core index']
  #allocation1 [shape = 'u32[72,128]{1,0:T(1,128)}', space=vmem, size = 0x9000, scoped, tag = 'internal scratch']
  #allocation2 [shape = 'bf16[8,128]{1,0:T(8,128)(2,1)}', space=vmem, size = 0x800, scoped, tag = 'scratch operand']
  %s0 = inlined_call_operand.hbm [shape: bf16[16,128], index: 0, kind: input, shape index: {}]
  %s1 = inlined_call_operand.hbm [shape: bf16[128,128], index: 1, kind: input, shape index: {}]
  %s2 = inlined_call_operand.vmem [shape: f32[1,128], index: 2, kind: input, shape index: {}]
  %s3 = inlined_call_operand.hbm [shape: f32[1,128], index: 3, kind: input, shape index: {}]
  %s4 = inlined_call_operand.hbm [shape: f32[1,128], index: 4, kind: input, shape index: {}]
  %s5 = inlined_call_operand.hbm [shape: bf16[256,128], index: 5, kind: input, shape index: {}]
  %s6 = inlined_call_operand.vmem [shape: f32[1,256], index: 6, kind: input, shape index: {}]
  %s7 = inlined_call_operand.hbm [shape: f32[16,256], index: 7, kind: output, shape index: {}]
  %s8 = sld [smem:[#allocation0]]
  $region85: #{tpu_custom_call.1} parent=0
    _
  %s10 = ssub.s32 1, %s8
  %s11 = scalar_select 0, %s10, %s8
  $region1: #{tpu_custom_call.1} parent=0
    #allocation3 [shape = 'u8[4096]{0}', space=vmem, size = 0x1000, scoped, tag = 'input window, operand 0']
    #allocation4 [shape = 's32[2]{0}', space=sflag, size = 0x8, scoped, tag = 'scoped memory for tpu_custom_call.1']
    #allocation5 [shape = 's32[2]{0}', space=sflag, size = 0x8, scoped, tag = 'scoped memory for tpu_custom_call.1']
    #allocation6 [shape = 'u8[32768]{0}', space=vmem, size = 0x8000, scoped, tag = 'input window, operand 1, single buffered']
    #allocation7 [shape = 's32[1]{0}', space=sflag, size = 0x4, scoped, tag = 'scoped memory for tpu_custom_call.1']
    #allocation8 [shape = 'u8[512]{0}', space=vmem, size = 0x400, scoped, tag = 'input window, operand 3, single buffered']
    #allocation9 [shape = 'u8[512]{0}', space=vmem, size = 0x400, scoped, tag = 'input window, operand 4, single buffered']
    #allocation10 [shape = 's32[1]{0}', space=sflag, size = 0x4, scoped, tag = 'scoped memory for tpu_custom_call.1']
    #allocation11 [shape = 'u8[65536]{0}', space=vmem, size = 0x10000, scoped, tag = 'input window, operand 5']
    #allocation12 [shape = 'u8[8192]{0}', space=vmem, size = 0x2000, scoped, tag = 'output window, operand 0']
    %12 = vsyncpa [#allocation4], 0
    %s13 = scalar_lea.sflag [#allocation4], 1
    %14 = vsyncpa %s13, 0
    %15 = vsyncpa [#allocation7], 0
    %16 = vsyncpa [#allocation10], 0
    %17 = vsyncpa [#allocation5], 0
    %s18 = scalar_lea.sflag [#allocation5], 1
    %19 = vsyncpa %s18, 0
    loop: start=0, step=1, limit=6
    $region2: #{tpu_custom_call.1} parent=1 // loop_pre_header
      _
    $region3: #{tpu_custom_call.1} parent=1 // loop_header
      %s21 = sphi 0, %s25
      %p22 = scmp.ge.s32.totalorder %s21, 6
      %s28 = sphi 0, %s40
      %s29 = sphi 0, %s36
      %s30 = sphi 0, %s28
      %s31 = sphi 0, %s29
      %s32 = sphi 0, %s30
      %s33 = sphi 0, %s31
      %s43 = sphi 0, %s45
      %s46 = sphi 0, %s43
      %s47 = sphi 0, %s46
      %s63 = sphi 0, %s47
      %s67 = sphi 0, %s67
      %s69 = sphi 0, %s67
      %s70 = sphi 0, %s69
      %s84 = sphi 0, %s70
      %s88 = sphi 0, %s88
      %s90 = sphi 0, %s88
      %s91 = sphi 0, %s90
      %s105 = sphi 0, %s91
      %s109 = sphi 0, %s109
      %s111 = sphi 0, %s109
      %s112 = sphi 0, %s111
      %s126 = sphi 0, %s112
      %s130 = sphi 0, %s130
      %s132 = sphi 0, %s130
      %s133 = sphi 0, %s132
      %s147 = sphi 0, %s133
      %s153 = sphi 0, %s155
      %s156 = sphi 0, %s153
      %s157 = sphi 0, %s156
      %s173 = sphi 0, %s157
      %s179 = sphi 0, %s181
      %s182 = sphi 0, %s179
      %s183 = sphi 0, %s182
      %s199 = sphi 0, %s183
      %s207 = sphi 0, %s209
      %s210 = sphi 0, %s207
      %s211 = sphi 0, %s210
      %s227 = sphi 0, %s211
    $region4: #{tpu_custom_call.1} parent=1 // loop_header_branch
      %24 = sbr.rel (%p22) target = $region8
    $region5: #{tpu_custom_call.1} parent=1 // loop_body
      %s26 = ssub.s32 %s21, 1
      %s27 = ssub.s32 %s21, 2
      %s34 = sadd.s32 1, %s29
      %p35 = scmp.ge.s32.totalorder %s34, 2
      %s36 = scalar_select %p35, 0, %s34
      %s37 = sadd.s32 1, %s28
      %s38 = scalar_select %p35, %s37, %s28
      %p39 = scmp.ge.s32.totalorder %s38, 2
      %s40 = scalar_select %p39, 0, %s38
      %s41 = ssub.s32 %s28, %s40
      %p42 = scmp.eq.s32.totalorder %s41, 0
      %s44 = sadd.s32 %s43, 1
      %s45 = scalar_select %p42, %s43, %s44
      %p48 = pneg %p42
      %p49 = scmp.eq.s32.totalorder %s21, 3
      %p50 = por %p48, %p49
      %p51 = scmp.ne.s32.totalorder %s43, %s46
      %p52 = scmp.eq.s32.totalorder %s21, 0
      %p53 = por %p51, %p52
      %p54 = scmp.ne.s32.totalorder %s43, %s46
      %p55 = scmp.eq.s32.totalorder %s26, 3
      %p56 = por %p54, %p55
      %p57 = scmp.ne.s32.totalorder %s46, %s47
      %p58 = scmp.eq.s32.totalorder %s26, 0
      %p59 = por %p57, %p58
      %p60 = scmp.ne.s32.totalorder %s46, %s47
      %p61 = scmp.eq.s32.totalorder %s27, 3
      %p62 = por %p60, %p61
      %p64 = scmp.ne.s32.totalorder %s47, %s63
      %p65 = scmp.eq.s32.totalorder %s27, 0
      %p66 = por %p64, %p65
      %s68 = sadd.s32 %s67, 1
      %p71 = scmp.eq.s32.totalorder %s21, 3
      %p72 = scmp.ne.s32.totalorder %s67, %s69
      %p73 = scmp.eq.s32.totalorder %s21, 0
      %p74 = por %p72, %p73
      %p75 = scmp.ne.s32.totalorder %s67, %s69
      %p76 = scmp.eq.s32.totalorder %s26, 3
      %p77 = por %p75, %p76
      %p78 = scmp.ne.s32.totalorder %s69, %s70
      %p79 = scmp.eq.s32.totalorder %s26, 0
      %p80 = por %p78, %p79
      %p81 = scmp.ne.s32.totalorder %s69, %s70
      %p82 = scmp.eq.s32.totalorder %s27, 3
      %p83 = por %p81, %p82
      %p85 = scmp.ne.s32.totalorder %s70, %s84
      %p86 = scmp.eq.s32.totalorder %s27, 0
      %p87 = por %p85, %p86
      %s89 = sadd.s32 %s88, 1
      %p92 = scmp.eq.s32.totalorder %s21, 3
      %p93 = scmp.ne.s32.totalorder %s88, %s90
      %p94 = scmp.eq.s32.totalorder %s21, 0
      %p95 = por %p93, %p94
      %p96 = scmp.ne.s32.totalorder %s88, %s90
      %p97 = scmp.eq.s32.totalorder %s26, 3
      %p98 = por %p96, %p97
      %p99 = scmp.ne.s32.totalorder %s90, %s91
      %p100 = scmp.eq.s32.totalorder %s26, 0
      %p101 = por %p99, %p100
      %p102 = scmp.ne.s32.totalorder %s90, %s91
      %p103 = scmp.eq.s32.totalorder %s27, 3
      %p104 = por %p102, %p103
      %p106 = scmp.ne.s32.totalorder %s91, %s105
      %p107 = scmp.eq.s32.totalorder %s27, 0
      %p108 = por %p106, %p107
      %s110 = sadd.s32 %s109, 1
      %p113 = scmp.eq.s32.totalorder %s21, 3
      %p114 = scmp.ne.s32.totalorder %s109, %s111
      %p115 = scmp.eq.s32.totalorder %s21, 0
      %p116 = por %p114, %p115
      %p117 = scmp.ne.s32.totalorder %s109, %s111
      %p118 = scmp.eq.s32.totalorder %s26, 3
      %p119 = por %p117, %p118
      %p120 = scmp.ne.s32.totalorder %s111, %s112
      %p121 = scmp.eq.s32.totalorder %s26, 0
      %p122 = por %p120, %p121
      %p123 = scmp.ne.s32.totalorder %s111, %s112
      %p124 = scmp.eq.s32.totalorder %s27, 3
      %p125 = por %p123, %p124
      %p127 = scmp.ne.s32.totalorder %s112, %s126
      %p128 = scmp.eq.s32.totalorder %s27, 0
      %p129 = por %p127, %p128
      %s131 = sadd.s32 %s130, 1
      %p134 = scmp.eq.s32.totalorder %s21, 3
      %p135 = scmp.ne.s32.totalorder %s130, %s132
      %p136 = scmp.eq.s32.totalorder %s21, 0
      %p137 = por %p135, %p136
      %p138 = scmp.ne.s32.totalorder %s130, %s132
      %p139 = scmp.eq.s32.totalorder %s26, 3
      %p140 = por %p138, %p139
      %p141 = scmp.ne.s32.totalorder %s132, %s133
      %p142 = scmp.eq.s32.totalorder %s26, 0
      %p143 = por %p141, %p142
      %p144 = scmp.ne.s32.totalorder %s132, %s133
      %p145 = scmp.eq.s32.totalorder %s27, 3
      %p146 = por %p144, %p145
      %p148 = scmp.ne.s32.totalorder %s133, %s147
      %p149 = scmp.eq.s32.totalorder %s27, 0
      %p150 = por %p148, %p149
      %s151 = ssub.s32 %s29, %s36
      %p152 = scmp.eq.s32.totalorder %s151, 0
      %s154 = sadd.s32 %s153, 1
      %s155 = scalar_select %p152, %s153, %s154
      %p158 = pneg %p152
      %p159 = scmp.eq.s32.totalorder %s21, 3
      %p160 = por %p158, %p159
      %p161 = scmp.ne.s32.totalorder %s153, %s156
      %p162 = scmp.eq.s32.totalorder %s21, 0
      %p163 = por %p161, %p162
      %p164 = scmp.ne.s32.totalorder %s153, %s156
      %p165 = scmp.eq.s32.totalorder %s26, 3
      %p166 = por %p164, %p165
      %p167 = scmp.ne.s32.totalorder %s156, %s157
      %p168 = scmp.eq.s32.totalorder %s26, 0
      %p169 = por %p167, %p168
      %p170 = scmp.ne.s32.totalorder %s156, %s157
      %p171 = scmp.eq.s32.totalorder %s27, 3
      %p172 = por %p170, %p171
      %p174 = scmp.ne.s32.totalorder %s157, %s173
      %p175 = scmp.eq.s32.totalorder %s27, 0
      %p176 = por %p174, %p175
      %s177 = ssub.s32 %s29, %s36
      %p178 = scmp.eq.s32.totalorder %s177, 0
      %s180 = sadd.s32 %s179, 1
      %s181 = scalar_select %p178, %s179, %s180
      %p184 = pneg %p178
      %p185 = scmp.eq.s32.totalorder %s21, 3
      %p186 = por %p184, %p185
      %p187 = scmp.ne.s32.totalorder %s179, %s182
      %p188 = scmp.eq.s32.totalorder %s21, 0
      %p189 = por %p187, %p188
      %p190 = scmp.ne.s32.totalorder %s179, %s182
      %p191 = scmp.eq.s32.totalorder %s26, 3
      %p192 = por %p190, %p191
      %p193 = scmp.ne.s32.totalorder %s182, %s183
      %p194 = scmp.eq.s32.totalorder %s26, 0
      %p195 = por %p193, %p194
      %p196 = scmp.ne.s32.totalorder %s182, %s183
      %p197 = scmp.eq.s32.totalorder %s27, 3
      %p198 = por %p196, %p197
      %p200 = scmp.ne.s32.totalorder %s183, %s199
      %p201 = scmp.eq.s32.totalorder %s27, 0
      %p202 = por %p200, %p201
      %s203 = ssub.s32 %s28, %s40
      %s204 = ssub.s32 %s29, %s36
      %s205 = sor.u32 %s203, %s204
      %p206 = scmp.eq.s32.totalorder %s205, 0
      %s208 = sadd.s32 %s207, 1
      %s209 = scalar_select %p206, %s207, %s208
      %p212 = pneg %p206
      %p213 = scmp.eq.s32.totalorder %s21, 3
      %p214 = por %p212, %p213
      %p215 = scmp.ne.s32.totalorder %s207, %s210
      %p216 = scmp.eq.s32.totalorder %s21, 0
      %p217 = por %p215, %p216
      %p218 = scmp.ne.s32.totalorder %s207, %s210
      %p219 = scmp.eq.s32.totalorder %s26, 3
      %p220 = por %p218, %p219
      %p221 = scmp.ne.s32.totalorder %s210, %s211
      %p222 = scmp.eq.s32.totalorder %s26, 0
      %p223 = por %p221, %p222
      %p224 = scmp.ne.s32.totalorder %s210, %s211
      %p225 = scmp.eq.s32.totalorder %s27, 3
      %p226 = por %p224, %p225
      %p228 = scmp.ne.s32.totalorder %s211, %s227
      %p229 = scmp.eq.s32.totalorder %s27, 0
      %p230 = por %p228, %p229
      %p231 = scmp.le.s32.totalorder 1, %s21
      %p232 = scmp.lt.s32.totalorder %s21, 5
      %p233 = pnand %p231, %p232
      %p234 = pneg %p233
      // Predicated region
      $region9: #{tpu_custom_call.1} parent=5 // pred_check
        _
      $region10: #{tpu_custom_call.1} parent=5 // pred_check_branch
        %236 = sbr.rel (%p233) target = $region12
      $region11: #{tpu_custom_call.1} parent=5 // pred_region
        %s237 = ssub.s32 %s21, 1
        // Predicated region
        $region13: #{tpu_custom_call.1} parent=11 // pred_check
          %p238 = pneg %p80
        $region14: #{tpu_custom_call.1} parent=11 // pred_check_branch
          %240 = sbr.rel (%p238) target = $region16
        $region15: #{tpu_custom_call.1} parent=11 // pred_region
          %242 = vsyncadd [#allocation7], 0
          %s243 = sshll.u32 %s1, 4
          %s244 = int_to_ptr.hbm [resolvable:$true] %s243
          %s245 = sshll.u32 [#allocation6], 4
          %s246 = int_to_ptr.vmem [resolvable:$true] %s245
          %251 = dma.hbm_to_vmem [thread:$0]  %s244, 1024, %s246, [#allocation7], 64, 64, 4
        $region16: #{tpu_custom_call.1} parent=11 // pred_fallthru
          _
        // Predicated region
        $region17: #{tpu_custom_call.1} parent=11 // pred_check
          %p252 = pneg %p101
        $region18: #{tpu_custom_call.1} parent=11 // pred_check_branch
          %254 = sbr.rel (%p252) target = $region20
        $region19: #{tpu_custom_call.1} parent=11 // pred_region
          _
        $region20: #{tpu_custom_call.1} parent=11 // pred_fallthru
          _
        // Predicated region
        $region21: #{tpu_custom_call.1} parent=11 // pred_check
          %p255 = pneg %p122
        $region22: #{tpu_custom_call.1} parent=11 // pred_check_branch
          %257 = sbr.rel (%p255) target = $region24
        $region23: #{tpu_custom_call.1} parent=11 // pred_region
          %259 = vsyncadd [#allocation7], 0
          %s261 = sshll.u32 %s3, 4
          %s262 = int_to_ptr.hbm [resolvable:$true] %s261
          %s263 = sshll.u32 [#allocation8], 4
          %s264 = int_to_ptr.vmem [resolvable:$true] %s263
          %266 = dma.hbm_to_vmem [thread:$0]  %s262, 16, %s264, [#allocation7]
        $region24: #{tpu_custom_call.1} parent=11 // pred_fallthru
          _
        // Predicated region
        $region25: #{tpu_custom_call.1} parent=11 // pred_check
          %p267 = pneg %p143
        $region26: #{tpu_custom_call.1} parent=11 // pred_check_branch
          %269 = sbr.rel (%p267) target = $region28
        $region27: #{tpu_custom_call.1} parent=11 // pred_region
          %271 = vsyncadd [#allocation10], 0
          %s273 = sshll.u32 %s4, 4
          %s274 = int_to_ptr.hbm [resolvable:$true] %s273
          %s275 = sshll.u32 [#allocation9], 4
          %s276 = int_to_ptr.vmem [resolvable:$true] %s275
          %278 = dma.hbm_to_vmem [thread:$0]  %s274, 16, %s276, [#allocation10]
        $region28: #{tpu_custom_call.1} parent=11 // pred_fallthru
          _
      $region12: #{tpu_custom_call.1} parent=5 // pred_fallthru
        _
      %p279 = scmp.lt.s32.totalorder %s21, 4
      // Predicated region
      $region29: #{tpu_custom_call.1} parent=5 // pred_check
        %p280 = pneg %p279
      $region30: #{tpu_custom_call.1} parent=5 // pred_check_branch
        %282 = sbr.rel (%p280) target = $region32
      $region31: #{tpu_custom_call.1} parent=5 // pred_region
        // Predicated region
        $region33: #{tpu_custom_call.1} parent=31 // pred_check
          %p283 = pneg %p53
        $region34: #{tpu_custom_call.1} parent=31 // pred_check_branch
          %285 = sbr.rel (%p283) target = $region36
        $region35: #{tpu_custom_call.1} parent=31 // pred_region
          %s286 = sand.u32 %s21, 1
          %s287 = scalar_lea.sflag [#allocation4], %s286
          %s288 = sand.u32 %s43, 1
          %s289 = smul.addr %s288, 4
          %s290 = scalar_lea.vmem [#allocation3], %s289
          %292 = vsyncadd %s287, 0
          %s293 = smul.addr %s28, 4
          %s294 = scalar_lea.hbm %s0, %s293
          %s296 = sshll.u32 %s294, 4
          %s297 = int_to_ptr.hbm [resolvable:$true] %s296
          %s298 = sshll.u32 %s290, 4
          %s299 = int_to_ptr.vmem [resolvable:$true] %s298
          %301 = dma.hbm_to_vmem [thread:$0]  %s297, 64, %s299, %s287
        $region36: #{tpu_custom_call.1} parent=31 // pred_fallthru
          _
        // Predicated region
        $region37: #{tpu_custom_call.1} parent=31 // pred_check
          %p302 = pneg %p163
        $region38: #{tpu_custom_call.1} parent=31 // pred_check_branch
          %304 = sbr.rel (%p302) target = $region40
        $region39: #{tpu_custom_call.1} parent=31 // pred_region
          %s305 = sand.u32 %s21, 1
          %s306 = scalar_lea.sflag [#allocation4], %s305
          %s307 = sand.u32 %s153, 1
          %s308 = smul.addr %s307, 64
          %s309 = scalar_lea.vmem [#allocation11], %s308
          %s310 = smul.u32 16, %s29
          %312 = vsyncadd %s306, 0
          %s313 = smul.addr %s310, 4
          %s314 = scalar_lea.hbm %s5, %s313
          %s315 = sshll.u32 %s314, 4
          %s316 = int_to_ptr.hbm [resolvable:$true] %s315
          %s317 = sshll.u32 %s309, 4
          %s318 = int_to_ptr.vmem [resolvable:$true] %s317
          %323 = dma.hbm_to_vmem [thread:$0]  %s316, 1024, %s318, %s306, 64, 64, 4
        $region40: #{tpu_custom_call.1} parent=31 // pred_fallthru
          _
        // Predicated region
        $region41: #{tpu_custom_call.1} parent=31 // pred_check
          %p324 = pneg %p189
        $region42: #{tpu_custom_call.1} parent=31 // pred_check_branch
          %326 = sbr.rel (%p324) target = $region44
        $region43: #{tpu_custom_call.1} parent=31 // pred_region
          %p327 = scmp.lt.s32.totalorder %s29, 1
          %s328 = scalar_select %p327, %s29, 1
          %s329 = scalar_lea.vmem %s6, %s328
        $region44: #{tpu_custom_call.1} parent=31 // pred_fallthru
          _
      $region32: #{tpu_custom_call.1} parent=5 // pred_fallthru
        _
      %p330 = scmp.le.s32.totalorder 1, %s21
      %p331 = scmp.lt.s32.totalorder %s21, 5
      %p332 = pnand %p330, %p331
      %p333 = pneg %p332
      // Predicated region
      $region45: #{tpu_custom_call.1} parent=5 // pred_check
        _
      $region46: #{tpu_custom_call.1} parent=5 // pred_check_branch
        %335 = sbr.rel (%p332) target = $region48
      $region47: #{tpu_custom_call.1} parent=5 // pred_region
        %s336 = ssub.s32 %s21, 1
        %s337 = sand.u32 %s26, 1
        %s338 = scalar_lea.sflag [#allocation4], %s337
        %s339 = sand.u32 %s46, 1
        %s340 = smul.addr %s339, 4
        %s341 = scalar_lea.vmem [#allocation3], %s340
        // Predicated region
        $region49: #{tpu_custom_call.1} parent=47 // pred_check
          %p342 = pneg %p59
        $region50: #{tpu_custom_call.1} parent=47 // pred_check_branch
          %344 = sbr.rel (%p342) target = $region52
        $region51: #{tpu_custom_call.1} parent=47 // pred_region
          %346 = dma.done %s338, 64
        $region52: #{tpu_custom_call.1} parent=47 // pred_fallthru
          _
        // Predicated region
        $region53: #{tpu_custom_call.1} parent=47 // pred_check
          %p347 = pneg %p80
        $region54: #{tpu_custom_call.1} parent=47 // pred_check_branch
          %349 = sbr.rel (%p347) target = $region56
        $region55: #{tpu_custom_call.1} parent=47 // pred_region
          %351 = dma.done [#allocation7], 1024
        $region56: #{tpu_custom_call.1} parent=47 // pred_fallthru
          _
        // Predicated region
        $region57: #{tpu_custom_call.1} parent=47 // pred_check
          %p352 = pneg %p122
        $region58: #{tpu_custom_call.1} parent=47 // pred_check_branch
          %354 = sbr.rel (%p352) target = $region60
        $region59: #{tpu_custom_call.1} parent=47 // pred_region
          %356 = dma.done [#allocation7], 16
        $region60: #{tpu_custom_call.1} parent=47 // pred_fallthru
          _
        // Predicated region
        $region61: #{tpu_custom_call.1} parent=47 // pred_check
          %p357 = pneg %p143
        $region62: #{tpu_custom_call.1} parent=47 // pred_check_branch
          %359 = sbr.rel (%p357) target = $region64
        $region63: #{tpu_custom_call.1} parent=47 // pred_region
          %361 = dma.done [#allocation10], 16
        $region64: #{tpu_custom_call.1} parent=47 // pred_fallthru
          _
        %s362 = sand.u32 %s26, 1
        %s363 = scalar_lea.sflag [#allocation4], %s362
        %s364 = sand.u32 %s156, 1
        %s365 = smul.addr %s364, 64
        %s366 = scalar_lea.vmem [#allocation11], %s365
        // Predicated region
        $region65: #{tpu_custom_call.1} parent=47 // pred_check
          %p367 = pneg %p169
        $region66: #{tpu_custom_call.1} parent=47 // pred_check_branch
          %369 = sbr.rel (%p367) target = $region68
        $region67: #{tpu_custom_call.1} parent=47 // pred_region
          %371 = dma.done %s363, 1024
        $region68: #{tpu_custom_call.1} parent=47 // pred_fallthru
          _
        %s372 = sand.u32 %s26, 1
        %s373 = scalar_lea.sflag [#allocation4], %s372
        %s374 = sand.u32 %s46, 1
        %s375 = smul.addr %s374, 4
        %s376 = scalar_lea.vmem [#allocation3], %s375
        %p377 = pneg %p59
        %p378 = pneg %p56
        %p379 = pneg %p80
        %p380 = pneg %p77
        %p381 = pneg %p101
        %p382 = pneg %p98
        %p383 = pneg %p122
        %p384 = pneg %p119
        %p385 = pneg %p143
        %p386 = pneg %p140
        %s387 = sand.u32 %s26, 1
        %s388 = scalar_lea.sflag [#allocation4], %s387
        %s389 = sand.u32 %s156, 1
        %s390 = smul.addr %s389, 64
        %s391 = scalar_lea.vmem [#allocation11], %s390
        %p392 = pneg %p169
        %p393 = pneg %p166
        %p394 = scmp.lt.s32.totalorder %s31, 1
        %s395 = scalar_select %p394, %s31, 1
        %s396 = scalar_lea.vmem %s6, %s395
        %p397 = pneg %p195
        %p398 = pneg %p192
        %p399 = pneg %p223
        %p400 = pneg %p220
        %s401 = sand.u32 %s210, 1
        %s402 = scalar_lea.sflag [#allocation5], %s401
        %s403 = sand.u32 %s210, 1
        %s404 = smul.addr %s403, 8
        %s405 = scalar_lea.vmem [#allocation12], %s404
        %s406 = smul.u32 16, %s31
        %p407 = scmp.lt.s32.totalorder %s31, 1
        %s408 = scalar_select %p407, %s31, 1
        %s409 = scalar_lea.vmem %s6, %s408
        %p410 = scmp.eq.s32.totalorder %s31, 0
        // Predicated region
        $region69: #{tpu_custom_call.1} parent=47 // pred_check
          %p411 = pneg %p410
        $region70: #{tpu_custom_call.1} parent=47 // pred_check_branch
          %413 = sbr.rel (%p411) target = $region72
        $region71: #{tpu_custom_call.1} parent=47 // pred_region
          %v414 = vld [vmem:[%s341] sm:$0xf]
          %v415 = vld [vmem:[#allocation6] sm:$0xf]
          %v416 = vld [vmem:[#allocation6 + $0x4] sm:$0xf]
          %v417 = vld [vmem:[#allocation6 + $0x8] sm:$0xf]
          %v418 = vld [vmem:[#allocation6 + $0xc] sm:$0xf]
          %v419 = vld [vmem:[#allocation6 + $0x10] sm:$0xf]
          %v420 = vld [vmem:[#allocation6 + $0x14] sm:$0xf]
          %v421 = vld [vmem:[#allocation6 + $0x18] sm:$0xf]
          %v422 = vld [vmem:[#allocation6 + $0x1c] sm:$0xf]
          %v423 = vld [vmem:[#allocation6 + $0x20] sm:$0xf]
          %v424 = vld [vmem:[#allocation6 + $0x24] sm:$0xf]
          %v425 = vld [vmem:[#allocation6 + $0x28] sm:$0xf]
          %v426 = vld [vmem:[#allocation6 + $0x2c] sm:$0xf]
          %v427 = vld [vmem:[#allocation6 + $0x30] sm:$0xf]
          %v428 = vld [vmem:[#allocation6 + $0x34] sm:$0xf]
          %v429 = vld [vmem:[#allocation6 + $0x38] sm:$0xf]
          %v430 = vld [vmem:[#allocation6 + $0x3c] sm:$0xf]
          %v431 = vld [vmem:[%s2] sm:$0x1]
          %v433 = vperm.slane %v431, 0
          %v451 = vunpack.c.l.b16 %v415
          %v452 = vunpack.c.l.b16 %v416
          %v453 = vunpack.c.l.b16 %v417
          %v454 = vunpack.c.l.b16 %v418
          %v455 = vunpack.c.l.b16 %v419
          %v456 = vunpack.c.l.b16 %v420
          %v457 = vunpack.c.l.b16 %v421
          %v458 = vunpack.c.l.b16 %v422
          %v459 = vunpack.c.l.b16 %v423
          %v460 = vunpack.c.l.b16 %v424
          %v461 = vunpack.c.l.b16 %v425
          %v462 = vunpack.c.l.b16 %v426
          %v463 = vunpack.c.l.b16 %v427
          %v464 = vunpack.c.l.b16 %v428
          %v465 = vunpack.c.l.b16 %v429
          %v466 = vunpack.c.l.b16 %v430
          %v467 = vpack.c.b16 %v452, %v451
          %v468 = vpack.c.b16 %v454, %v453
          %v469 = vpack.c.b16 %v456, %v455
          %v470 = vpack.c.b16 %v458, %v457
          %v471 = vpack.c.b16 %v460, %v459
          %v472 = vpack.c.b16 %v462, %v461
          %v473 = vpack.c.b16 %v464, %v463
          %v474 = vpack.c.b16 %v466, %v465
          %483 = vmatpush.bf16.xpose.msra.mxu0 %v474
          %484 = vmatpush.bf16.xpose.msra.mxu0 %v473
          %485 = vmatpush.bf16.xpose.msra.mxu0 %v472
          %486 = vmatpush.bf16.xpose.msra.mxu0 %v471
          %487 = vmatpush.bf16.xpose.msra.mxu0 %v470
          %488 = vmatpush.bf16.xpose.msra.mxu0 %v469
          %489 = vmatpush.bf16.xpose.msra.mxu0 %v468
          %490 = vmatpush.bf16.xpose.msra.mxu0 %v467
          %491 = vmatmul.bf16.gmra.mxu0 %v414
          %v492 = vpop.f32.mrf.mxu0
          %v493 = vadd.f32 %v433, %v492
          %v494 = vpop.f32.mrf.mxu0
          %495 = vdwg.mxu0
          %v496 = vmul.f32 %v493, 0.5
          %v497 = vmul.f32 %v493, 0.044715
          %v498 = vmul.f32 %v497, %v493
          %v499 = vmul.f32 %v498, %v493
          %v500 = vadd.f32 %v493, %v499
          %v501 = vmul.f32 %v500, 0.7978846
          %v502 = vtanh.pop %v501
          %v503 = vadd.f32 %v502, 1.0
          %v504 = vmul.f32 %v496, %v503
          %505 = vadd.xlane.f32.xlu0 %v504
          %v506 = vpop.xlane.xlu0 %505
          %v507 = vrcp.pop 128.0
          %v508 = vmul.f32 128.0, %v507
          %v509 = vsub.f32 1.0, %v508
          %v510 = vmul.f32 %v507, %v509
          %v511 = vadd.f32 %v507, %v510
          %vm512 = vweird.f32 %v507
          %v513 = vsel %vm512, %v507, %v511
          %v514 = vmul.f32 %v506, %v513
          %v515 = vsub.f32 %v504, %v514
          %v516 = vmul.f32 %v515, %v515
          %517 = vadd.xlane.f32.xlu0 %v516
          %v518 = vpop.xlane.xlu0 %517
          %v519 = vmul.f32 %v518, %v513
          %v520 = vadd.f32 %v519, 1e-05
          %v521 = vrsqrt.pop %v520
          %v522 = vmul.f32 %v521, %v520
          %v523 = vmul.f32 %v522, %v521
          %v524 = vmul.f32 0.5, %v523
          %v525 = vsub.f32 1.5, %v524
          %v526 = vmul.f32 %v521, %v525
          %vm527 = vweird.f32 %v520
          %vm528 = vweird.f32 %v521
          %vm529 = vmor %vm527, %vm528
          %v530 = vsel %vm529, %v521, %v526
          %v531 = vmul.f32 %v515, %v530
          %v532 = vld [vmem:[#allocation8] sm:$0x1]
          %v534 = vperm.slane %v532, 0
          %v536 = vmul.f32 %v531, %v534
          %v537 = vld [vmem:[#allocation9] sm:$0x1]
          %v539 = vperm.slane %v537, 0
          %v541 = vadd.f32 %v536, %v539
          %v542 = vpack.c.bf16 %v541, %v541
          %543 = vst [vmem:[#allocation2] sm:$0xf] %v542
        $region72: #{tpu_custom_call.1} parent=47 // pred_fallthru
          _
        %v544 = vld [vmem:[#allocation2] sm:$0xf]
        %v545 = vld [vmem:[%s366] sm:$0xf]
        %v546 = vld [vmem:[%s366 + $0x4] sm:$0xf]
        %v547 = vld [vmem:[%s366 + $0x8] sm:$0xf]
        %v548 = vld [vmem:[%s366 + $0xc] sm:$0xf]
        %v549 = vld [vmem:[%s366 + $0x10] sm:$0xf]
        %v550 = vld [vmem:[%s366 + $0x14] sm:$0xf]
        %v551 = vld [vmem:[%s366 + $0x18] sm:$0xf]
        %v552 = vld [vmem:[%s366 + $0x1c] sm:$0xf]
        %v553 = vld [vmem:[%s366 + $0x20] sm:$0xf]
        %v554 = vld [vmem:[%s366 + $0x24] sm:$0xf]
        %v555 = vld [vmem:[%s366 + $0x28] sm:$0xf]
        %v556 = vld [vmem:[%s366 + $0x2c] sm:$0xf]
        %v557 = vld [vmem:[%s366 + $0x30] sm:$0xf]
        %v558 = vld [vmem:[%s366 + $0x34] sm:$0xf]
        %v559 = vld [vmem:[%s366 + $0x38] sm:$0xf]
        %v560 = vld [vmem:[%s366 + $0x3c] sm:$0xf]
        %v561 = vld [vmem:[%s409] sm:$0x1]
        %v563 = vperm.slane %v561, 0
        %v581 = vunpack.c.l.b16 %v545
        %v582 = vunpack.c.l.b16 %v546
        %v583 = vunpack.c.l.b16 %v547
        %v584 = vunpack.c.l.b16 %v548
        %v585 = vunpack.c.l.b16 %v549
        %v586 = vunpack.c.l.b16 %v550
        %v587 = vunpack.c.l.b16 %v551
        %v588 = vunpack.c.l.b16 %v552
        %v589 = vunpack.c.l.b16 %v553
        %v590 = vunpack.c.l.b16 %v554
        %v591 = vunpack.c.l.b16 %v555
        %v592 = vunpack.c.l.b16 %v556
        %v593 = vunpack.c.l.b16 %v557
        %v594 = vunpack.c.l.b16 %v558
        %v595 = vunpack.c.l.b16 %v559
        %v596 = vunpack.c.l.b16 %v560
        %v597 = vpack.c.b16 %v582, %v581
        %v598 = vpack.c.b16 %v584, %v583
        %v599 = vpack.c.b16 %v586, %v585
        %v600 = vpack.c.b16 %v588, %v587
        %v601 = vpack.c.b16 %v590, %v589
        %v602 = vpack.c.b16 %v592, %v591
        %v603 = vpack.c.b16 %v594, %v593
        %v604 = vpack.c.b16 %v596, %v595
        %613 = vmatpush.bf16.xpose.msra.mxu0 %v604
        %614 = vmatpush.bf16.xpose.msra.mxu0 %v603
        %615 = vmatpush.bf16.xpose.msra.mxu0 %v602
        %616 = vmatpush.bf16.xpose.msra.mxu0 %v601
        %617 = vmatpush.bf16.xpose.msra.mxu0 %v600
        %618 = vmatpush.bf16.xpose.msra.mxu0 %v599
        %619 = vmatpush.bf16.xpose.msra.mxu0 %v598
        %620 = vmatpush.bf16.xpose.msra.mxu0 %v597
        %621 = vmatmul.bf16.gmra.mxu0 %v544
        %v622 = vpop.f32.mrf.mxu0
        %v623 = vadd.f32 %v563, %v622
        %v624 = vpop.f32.mrf.mxu0
        %625 = vdwg.mxu0
        %626 = vst [vmem:[%s405] sm:$0xff] %v623
        %s627 = sand.u32 %s210, 1
        %s628 = scalar_lea.sflag [#allocation5], %s627
        %s629 = sand.u32 %s210, 1
        %s630 = smul.addr %s629, 8
        %s631 = scalar_lea.vmem [#allocation12], %s630
        // Predicated region
        $region73: #{tpu_custom_call.1} parent=47 // pred_check
          %p632 = pneg %p220
        $region74: #{tpu_custom_call.1} parent=47 // pred_check_branch
          %634 = sbr.rel (%p632) target = $region76
        $region75: #{tpu_custom_call.1} parent=47 // pred_region
          %636 = vsyncadd %s628, 0
          %s637 = smul.addr %s30, 2
          %s638 = sadd.s32 %s31, %s637
          %s639 = smul.addr %s638, 8
          %s640 = scalar_lea.hbm %s7, %s639
          %s642 = sshll.u32 %s631, 4
          %s643 = int_to_ptr.vmem [resolvable:$true] %s642
          %s644 = sshll.u32 %s640, 4
          %s645 = int_to_ptr.hbm [resolvable:$true] %s644
          %647 = dma.vmem_to_hbm [thread:$0]  %s643, 128, %s645, %s628
        $region76: #{tpu_custom_call.1} parent=47 // pred_fallthru
          _
      $region48: #{tpu_custom_call.1} parent=5 // pred_fallthru
        _
      %p648 = scmp.le.s32.totalorder 2, %s21
      // Predicated region
      $region77: #{tpu_custom_call.1} parent=5 // pred_check
        %p649 = pneg %p648
      $region78: #{tpu_custom_call.1} parent=5 // pred_check_branch
        %651 = sbr.rel (%p649) target = $region80
      $region79: #{tpu_custom_call.1} parent=5 // pred_region
        %s652 = ssub.s32 %s21, 2
        // Predicated region
        $region81: #{tpu_custom_call.1} parent=79 // pred_check
          %p653 = pneg %p226
        $region82: #{tpu_custom_call.1} parent=79 // pred_check_branch
          %655 = sbr.rel (%p653) target = $region84
        $region83: #{tpu_custom_call.1} parent=79 // pred_region
          %s656 = sand.u32 %s211, 1
          %s657 = scalar_lea.sflag [#allocation5], %s656
          %s658 = sand.u32 %s211, 1
          %s659 = smul.addr %s658, 8
          %s660 = scalar_lea.vmem [#allocation12], %s659
          %662 = dma.done %s657, 128
        $region84: #{tpu_custom_call.1} parent=79 // pred_fallthru
          _
      $region80: #{tpu_custom_call.1} parent=5 // pred_fallthru
        _
    $region6: #{tpu_custom_call.1} parent=1 // loop_footer
      %s25 = sadd.s32 1, %s21
    $region7: #{tpu_custom_call.1} parent=1 // loop_footer_branch
      %20 = sbr.rel target = $region3
    $region8: #{tpu_custom_call.1} parent=1 // loop_exit
      _
    %663 = vsyncpa [#allocation4], 1
    %s664 = scalar_lea.sflag [#allocation4], 1
    %665 = vsyncpa %s664, 1
    %666 = vsyncpa [#allocation7], 1
    %667 = vsyncpa [#allocation10], 1
    %668 = vsyncpa [#allocation5], 1
    %s669 = scalar_lea.sflag [#allocation5], 1
    %670 = vsyncpa %s669, 1

</llo_original>
